<compile_context>
chip_gen: v5e
topology: v5e:2x2
jax: 0.10.0
libtpu: 0.0.40
codegen_flags: <defaults>
</compile_context>

<pallas_src>
import functools

import jax
import jax.numpy as jnp
from jax.experimental import pallas as pl
from jax.experimental.pallas import tpu as pltpu


def _mlp_conv_kernel(n_layers, *refs):
    # refs = (x_ref, w1, b1, w2, b2, ..., wN, bN, o_ref)
    x_ref = refs[0]
    o_ref = refs[-1]

    h = x_ref[0].astype(jnp.float32)                    # (C_in, tile_L)
    for i in range(n_layers):
        w = refs[1 + 2 * i][...].astype(jnp.float32)    # (C_out_i, C_in_i)
        b = refs[2 + 2 * i][...].astype(jnp.float32)    # (C_out_i, 1)
        h = jnp.dot(w, h, preferred_element_type=jnp.float32) + b
        if i != n_layers - 1:
            h = jnp.maximum(h, 0.0)                     # ReLU between layers
    o_ref[0] = h.astype(o_ref.dtype)                    # (C_out, tile_L)


def mlp_conv_pallas(x_ncl, weights, biases, *, tile_l=512):
    """x_ncl: (B, C_in, L); weights[i]: (C_out_i, C_in_i, 1); biases[i]: (C_out_i,)."""
    n_layers = len(weights)
    B, C_in, L = x_ncl.shape
    C_out = weights[-1].shape[0]

    # Lane tile along L: either the full extent (always legal) or a multiple
    # of 128 (unmasked, lane-aligned vld/vst); grid uses cdiv so ragged L is
    # handled by Pallas' partial-block masking, no assert on divisibility.
    if L <= tile_l:
        tl = L
    else:
        tl = tile_l
        assert tl % 128 == 0, "tile_l must be a multiple of 128 when tiling L"
    grid = (B, pl.cdiv(L, tl))

    # Inputs: x stays in NCL; weights packed as (C_out_i, C_in_i), bias as
    # (C_out_i, 1).  All weight/bias blocks are full-extent (legal regardless
    # of the (8,128) rule) and resident across the whole grid.
    kernel_args = [x_ncl]
    in_specs = [pl.BlockSpec((1, C_in, tl), lambda b, l: (b, 0, l))]
    for w, bvec in zip(weights, biases):
        w2 = w[:, :, 0]                                 # (C_out_i, C_in_i)
        b2 = bvec.reshape(-1, 1)                        # (C_out_i, 1)
        kernel_args += [w2, b2]
        in_specs += [
            pl.BlockSpec(w2.shape, lambda b, l: (0, 0)),
            pl.BlockSpec(b2.shape, lambda b, l: (0, 0)),
        ]

    itemsize = jnp.dtype(x_ncl.dtype).itemsize
    cost = pl.CostEstimate(
        flops=2 * B * L * sum(int(w.shape[0]) * int(w.shape[1]) for w in weights),
        transcendentals=0,
        bytes_accessed=(
            x_ncl.size * itemsize                       # stream x in
            + B * C_out * L * itemsize                  # stream out
            + sum(int(w.size) * itemsize for w in weights)
            + sum(int(bv.size) * itemsize for bv in biases)
        ),
    )

    out = pl.pallas_call(
        functools.partial(_mlp_conv_kernel, n_layers),
        out_shape=jax.ShapeDtypeStruct((B, C_out, L), x_ncl.dtype),
        grid_spec=pltpu.PrefetchScalarGridSpec(
            num_scalar_prefetch=0,
            grid=grid,
            in_specs=in_specs,
            out_specs=pl.BlockSpec((1, C_out, tl), lambda b, l: (b, 0, l)),
        ),
        compiler_params=pltpu.CompilerParams(
            dimension_semantics=("parallel", "parallel")),
        cost_estimate=cost,
    )(*kernel_args)
    return out


def mlp_conv_ref(x_ncl, weights, biases):
    """Pure-JAX reference matching the PyTorch forward."""
    h = x_ncl
    n = len(weights)
    for i, (w, b) in enumerate(zip(weights, biases)):
        h = jnp.einsum("bcl,oc->bol", h, w[:, :, 0]) + b[None, :, None]
        if i != n - 1:
            h = jnp.maximum(h, 0.0)
    return h


if __name__ == "__main__":
    # MLPConv(dims=[4, 32, 32, 8]) applied to x of shape (B=2, C=4, L=16)
    dims = [4, 32, 32, 8]
    B, L = 2, 16

    key = jax.random.PRNGKey(0)
    keys = jax.random.split(key, 2 + 2 * (len(dims) - 1))

    x = jax.random.normal(keys[0], (B, dims[0], L), dtype=jnp.float32)

    weights, biases = [], []
    for i in range(len(dims) - 1):
        c_in, c_out = dims[i], dims[i + 1]
        bound = 1.0 / (c_in ** 0.5)
        w = jax.random.uniform(keys[1 + 2 * i], (c_out, c_in, 1),
                               minval=-bound, maxval=bound, dtype=jnp.float32)
        b = jax.random.uniform(keys[2 + 2 * i], (c_out,),
                               minval=-bound, maxval=bound, dtype=jnp.float32)
        weights.append(w)
        biases.append(b)

    # Small-shape check (single full-extent L tile).
    out = mlp_conv_pallas(x, weights, biases)
    out = jax.block_until_ready(out)
    ref = mlp_conv_ref(x, weights, biases)
    assert out.shape == (B, dims[-1], L), out.shape
    assert jnp.allclose(out, ref, atol=1e-5, rtol=1e-5), \
        float(jnp.max(jnp.abs(out - ref)))

    # Tiled-path check: L not divisible by the 512 tile (exercises cdiv grid
    # and masked writeback of the partial last block).
    L2 = 640
    x2 = jax.random.normal(keys[-1], (1, dims[0], L2), dtype=jnp.float32)
    out2 = jax.block_until_ready(mlp_conv_pallas(x2, weights, biases, tile_l=512))
    ref2 = mlp_conv_ref(x2, weights, biases)
    assert out2.shape == (1, dims[-1], L2), out2.shape
    assert jnp.allclose(out2, ref2, atol=1e-5, rtol=1e-5), \
        float(jnp.max(jnp.abs(out2 - ref2)))

    print("KERNEL_OK")
</pallas_src>

<mosaic_0001>
module attributes {stable_mosaic.version = 11 : i64} {
  func.func @_mlp_conv_kernel(%arg0: i32, %arg1: i32, %arg2: memref<1x4x16xf32, #tpu.memory_space<vmem>>, %arg3: memref<32x4xf32, #tpu.memory_space<vmem>>, %arg4: memref<32x1xf32, #tpu.memory_space<vmem>>, %arg5: memref<32x32xf32, #tpu.memory_space<vmem>>, %arg6: memref<32x1xf32, #tpu.memory_space<vmem>>, %arg7: memref<8x32xf32, #tpu.memory_space<vmem>>, %arg8: memref<8x1xf32, #tpu.memory_space<vmem>>, %arg9: memref<1x8x16xf32, #tpu.memory_space<vmem>>) attributes {dimension_semantics = [#tpu.dimension_semantics<parallel>, #tpu.dimension_semantics<parallel>], iteration_bounds = array<i64: 2, 1>, scalar_prefetch = 0 : i64, scratch_operands = 0 : i64, tpu.core_type = #tpu.core_type<tc>, window_params = [{transform_indices = @transform_0, window_bounds = array<i64: 1, 4, 16>}, {pipeline_mode = #tpu.pipeline_mode<synchronous>, transform_indices = @transform_1, window_bounds = array<i64: 32, 4>}, {pipeline_mode = #tpu.pipeline_mode<synchronous>, transform_indices = @transform_2, window_bounds = array<i64: 32, 1>}, {pipeline_mode = #tpu.pipeline_mode<synchronous>, transform_indices = @transform_3, window_bounds = array<i64: 32, 32>}, {pipeline_mode = #tpu.pipeline_mode<synchronous>, transform_indices = @transform_4, window_bounds = array<i64: 32, 1>}, {pipeline_mode = #tpu.pipeline_mode<synchronous>, transform_indices = @transform_5, window_bounds = array<i64: 8, 32>}, {pipeline_mode = #tpu.pipeline_mode<synchronous>, transform_indices = @transform_6, window_bounds = array<i64: 8, 1>}, {transform_indices = @transform_7, window_bounds = array<i64: 1, 8, 16>}]} {
    %c0 = arith.constant 0 : index
    %c0_0 = arith.constant 0 : index
    %c0_1 = arith.constant 0 : index
    %0 = vector.load %arg2[%c0, %c0_0, %c0_1] : memref<1x4x16xf32, #tpu.memory_space<vmem>>, vector<1x4x16xf32>
    %1 = vector.shape_cast %0 : vector<1x4x16xf32> to vector<4x16xf32>
    %c0_2 = arith.constant 0 : index
    %c0_3 = arith.constant 0 : index
    %2 = vector.load %arg3[%c0_2, %c0_3] : memref<32x4xf32, #tpu.memory_space<vmem>>, vector<32x4xf32>
    %c0_4 = arith.constant 0 : index
    %c0_5 = arith.constant 0 : index
    %3 = vector.load %arg4[%c0_4, %c0_5] : memref<32x1xf32, #tpu.memory_space<vmem>>, vector<32x1xf32>
    %cst = arith.constant dense<0.000000e+00> : vector<32x16xf32>
    %4 = tpu.matmul %2, %1, %cst {dimension_numbers = #tpu.dot_dimension_numbers<[1], [0], [0], [1], [0, 0, 1, 1], [], []>} : vector<32x4xf32>, vector<4x16xf32>, vector<32x16xf32> -> vector<32x16xf32>
    %5 = vector.broadcast %3 : vector<32x1xf32> to vector<32x16xf32>
    %6 = arith.addf %4, %5 : vector<32x16xf32>
    %cst_6 = arith.constant 0.000000e+00 : f32
    %7 = vector.broadcast %cst_6 : f32 to vector<32x16xf32>
    %8 = arith.maximumf %6, %7 : vector<32x16xf32>
    %c0_7 = arith.constant 0 : index
    %c0_8 = arith.constant 0 : index
    %9 = vector.load %arg5[%c0_7, %c0_8] : memref<32x32xf32, #tpu.memory_space<vmem>>, vector<32x32xf32>
    %c0_9 = arith.constant 0 : index
    %c0_10 = arith.constant 0 : index
    %10 = vector.load %arg6[%c0_9, %c0_10] : memref<32x1xf32, #tpu.memory_space<vmem>>, vector<32x1xf32>
    %cst_11 = arith.constant dense<0.000000e+00> : vector<32x16xf32>
    %11 = tpu.matmul %9, %8, %cst_11 {dimension_numbers = #tpu.dot_dimension_numbers<[1], [0], [0], [1], [0, 0, 1, 1], [], []>} : vector<32x32xf32>, vector<32x16xf32>, vector<32x16xf32> -> vector<32x16xf32>
    %12 = vector.broadcast %10 : vector<32x1xf32> to vector<32x16xf32>
    %13 = arith.addf %11, %12 : vector<32x16xf32>
    %cst_12 = arith.constant 0.000000e+00 : f32
    %14 = vector.broadcast %cst_12 : f32 to vector<32x16xf32>
    %15 = arith.maximumf %13, %14 : vector<32x16xf32>
    %c0_13 = arith.constant 0 : index
    %c0_14 = arith.constant 0 : index
    %16 = vector.load %arg7[%c0_13, %c0_14] : memref<8x32xf32, #tpu.memory_space<vmem>>, vector<8x32xf32>
    %c0_15 = arith.constant 0 : index
    %c0_16 = arith.constant 0 : index
    %17 = vector.load %arg8[%c0_15, %c0_16] : memref<8x1xf32, #tpu.memory_space<vmem>>, vector<8x1xf32>
    %cst_17 = arith.constant dense<0.000000e+00> : vector<8x16xf32>
    %18 = tpu.matmul %16, %15, %cst_17 {dimension_numbers = #tpu.dot_dimension_numbers<[1], [0], [0], [1], [0, 0, 1, 1], [], []>} : vector<8x32xf32>, vector<32x16xf32>, vector<8x16xf32> -> vector<8x16xf32>
    %19 = vector.broadcast %17 : vector<8x1xf32> to vector<8x16xf32>
    %20 = arith.addf %18, %19 : vector<8x16xf32>
    %c0_18 = arith.constant 0 : index
    %c0_19 = arith.constant 0 : index
    %c0_20 = arith.constant 0 : index
    %21 = vector.load %arg9[%c0_18, %c0_19, %c0_20] : memref<1x8x16xf32, #tpu.memory_space<vmem>>, vector<1x8x16xf32>
    %22 = vector.shape_cast %21 : vector<1x8x16xf32> to vector<8x16xf32>
    %23 = vector.shape_cast %20 : vector<8x16xf32> to vector<1x8x16xf32>
    tpu.vector_store %arg9[%c0_18, %c0_19, %c0_20], %23 {strides = array<i32>} : memref<1x8x16xf32, #tpu.memory_space<vmem>>, vector<1x8x16xf32>,
    return
  }
  func.func @transform_0(%arg0: i32, %arg1: i32) -> (i32, i32, i32) {
    %c0_i32 = arith.constant 0 : i32
    %c0_i32_0 = arith.constant 0 : i32
    return %arg0, %c0_i32, %arg1 : i32, i32, i32
  }
  func.func @transform_1(%arg0: i32, %arg1: i32) -> (i32, i32) {
    %c0_i32 = arith.constant 0 : i32
    %c0_i32_0 = arith.constant 0 : i32
    %c0_i32_1 = arith.constant 0 : i32
    return %c0_i32, %c0_i32_0 : i32, i32
  }
  func.func @transform_2(%arg0: i32, %arg1: i32) -> (i32, i32) {
    %c0_i32 = arith.constant 0 : i32
    %c0_i32_0 = arith.constant 0 : i32
    %c0_i32_1 = arith.constant 0 : i32
    return %c0_i32, %c0_i32_0 : i32, i32
  }
  func.func @transform_3(%arg0: i32, %arg1: i32) -> (i32, i32) {
    %c0_i32 = arith.constant 0 : i32
    %c0_i32_0 = arith.constant 0 : i32
    %c0_i32_1 = arith.constant 0 : i32
    return %c0_i32, %c0_i32_0 : i32, i32
  }
  func.func @transform_4(%arg0: i32, %arg1: i32) -> (i32, i32) {
    %c0_i32 = arith.constant 0 : i32
    %c0_i32_0 = arith.constant 0 : i32
    %c0_i32_1 = arith.constant 0 : i32
    return %c0_i32, %c0_i32_0 : i32, i32
  }
  func.func @transform_5(%arg0: i32, %arg1: i32) -> (i32, i32) {
    %c0_i32 = arith.constant 0 : i32
    %c0_i32_0 = arith.constant 0 : i32
    %c0_i32_1 = arith.constant 0 : i32
    return %c0_i32, %c0_i32_0 : i32, i32
  }
  func.func @transform_6(%arg0: i32, %arg1: i32) -> (i32, i32) {
    %c0_i32 = arith.constant 0 : i32
    %c0_i32_0 = arith.constant 0 : i32
    %c0_i32_1 = arith.constant 0 : i32
    return %c0_i32, %c0_i32_0 : i32, i32
  }
  func.func @transform_7(%arg0: i32, %arg1: i32) -> (i32, i32, i32) {
    %c0_i32 = arith.constant 0 : i32
    %c0_i32_0 = arith.constant 0 : i32
    return %arg0, %c0_i32, %arg1 : i32, i32, i32
  }
}

</mosaic_0001>

<llo_original>
// kernel: tpu_custom_call.1
$region0: #{tpu_custom_call.1}
  #allocation0 [shape = 'u32[]', space=smem, size = 0x4, offset = 0x4, fixed_abs, tag = 'smem constant byte address 0x4 - core index']
  #allocation1 [shape = 'u32[72,128]{1,0:T(1,128)}', space=vmem, size = 0x9000, scoped, tag = 'internal scratch']
  %s0 = inlined_call_operand.vmem [shape: f32[2,4,16], index: 0, kind: input, shape index: {}]
  %s1 = inlined_call_operand.vmem [shape: f32[32,4], index: 1, kind: input, shape index: {}]
  %s2 = inlined_call_operand.vmem [shape: f32[32,1], index: 2, kind: input, shape index: {}]
  %s3 = inlined_call_operand.vmem [shape: f32[32,32], index: 3, kind: input, shape index: {}]
  %s4 = inlined_call_operand.vmem [shape: f32[32,1], index: 4, kind: input, shape index: {}]
  %s5 = inlined_call_operand.vmem [shape: f32[8,32], index: 5, kind: input, shape index: {}]
  %s6 = inlined_call_operand.vmem [shape: f32[8,1], index: 6, kind: input, shape index: {}]
  %s7 = inlined_call_operand.hbm [shape: f32[2,8,16], index: 7, kind: output, shape index: {}]
  %s8 = sld [smem:[#allocation0]]
  $region61: #{tpu_custom_call.1} parent=0
    _
  %s10 = ssub.s32 1, %s8
  %s11 = scalar_select 0, %s10, %s8
  $region1: #{tpu_custom_call.1} parent=0
    #allocation2 [shape = 'u8[8192]{0}', space=vmem, size = 0x2000, scoped, tag = 'output window, operand 0']
    #allocation3 [shape = 's32[2]{0}', space=sflag, size = 0x8, scoped, tag = 'scoped memory for tpu_custom_call.1']
    %12 = vsyncpa [#allocation3], 0
    %s13 = scalar_lea.sflag [#allocation3], 1
    %14 = vsyncpa %s13, 0
    loop: start=0, step=1, limit=4
    $region2: #{tpu_custom_call.1} parent=1 // loop_pre_header
      _
    $region3: #{tpu_custom_call.1} parent=1 // loop_header
      %s16 = sphi 0, %s20
      %p17 = scmp.ge.s32.totalorder %s16, 4
      %s23 = sphi 0, %s35
      %s24 = sphi 0, %s31
      %s25 = sphi 0, %s23
      %s26 = sphi 0, %s24
      %s27 = sphi 0, %s25
      %s28 = sphi 0, %s26
      %s40 = sphi 0, %s42
      %s43 = sphi 0, %s40
      %s44 = sphi 0, %s43
      %s60 = sphi 0, %s44
      %s64 = sphi 0, %s64
      %s66 = sphi 0, %s64
      %s67 = sphi 0, %s66
      %s81 = sphi 0, %s67
      %s85 = sphi 0, %s85
      %s87 = sphi 0, %s85
      %s88 = sphi 0, %s87
      %s102 = sphi 0, %s88
      %s106 = sphi 0, %s106
      %s108 = sphi 0, %s106
      %s109 = sphi 0, %s108
      %s123 = sphi 0, %s109
      %s127 = sphi 0, %s127
      %s129 = sphi 0, %s127
      %s130 = sphi 0, %s129
      %s144 = sphi 0, %s130
      %s148 = sphi 0, %s148
      %s150 = sphi 0, %s148
      %s151 = sphi 0, %s150
      %s165 = sphi 0, %s151
      %s169 = sphi 0, %s169
      %s171 = sphi 0, %s169
      %s172 = sphi 0, %s171
      %s186 = sphi 0, %s172
      %s194 = sphi 0, %s196
      %s197 = sphi 0, %s194
      %s198 = sphi 0, %s197
      %s214 = sphi 0, %s198
    $region4: #{tpu_custom_call.1} parent=1 // loop_header_branch
      %19 = sbr.rel (%p17) target = $region8
    $region5: #{tpu_custom_call.1} parent=1 // loop_body
      %s21 = ssub.s32 %s16, 1
      %s22 = ssub.s32 %s16, 2
      %s29 = sadd.s32 1, %s24
      %p30 = scmp.ge.s32.totalorder %s29, 1
      %s31 = scalar_select %p30, 0, %s29
      %s32 = sadd.s32 1, %s23
      %s33 = scalar_select %p30, %s32, %s23
      %p34 = scmp.ge.s32.totalorder %s33, 2
      %s35 = scalar_select %p34, 0, %s33
      %s36 = ssub.s32 %s23, %s35
      %s37 = ssub.s32 %s24, %s31
      %s38 = sor.u32 %s36, %s37
      %p39 = scmp.eq.s32.totalorder %s38, 0
      %s41 = sadd.s32 %s40, 1
      %s42 = scalar_select %p39, %s40, %s41
      %p45 = pneg %p39
      %p46 = scmp.eq.s32.totalorder %s16, 1
      %p47 = por %p45, %p46
      %p48 = scmp.ne.s32.totalorder %s40, %s43
      %p49 = scmp.eq.s32.totalorder %s16, 0
      %p50 = por %p48, %p49
      %p51 = scmp.ne.s32.totalorder %s40, %s43
      %p52 = scmp.eq.s32.totalorder %s21, 1
      %p53 = por %p51, %p52
      %p54 = scmp.ne.s32.totalorder %s43, %s44
      %p55 = scmp.eq.s32.totalorder %s21, 0
      %p56 = por %p54, %p55
      %p57 = scmp.ne.s32.totalorder %s43, %s44
      %p58 = scmp.eq.s32.totalorder %s22, 1
      %p59 = por %p57, %p58
      %p61 = scmp.ne.s32.totalorder %s44, %s60
      %p62 = scmp.eq.s32.totalorder %s22, 0
      %p63 = por %p61, %p62
      %s65 = sadd.s32 %s64, 1
      %p68 = scmp.eq.s32.totalorder %s16, 1
      %p69 = scmp.ne.s32.totalorder %s64, %s66
      %p70 = scmp.eq.s32.totalorder %s16, 0
      %p71 = por %p69, %p70
      %p72 = scmp.ne.s32.totalorder %s64, %s66
      %p73 = scmp.eq.s32.totalorder %s21, 1
      %p74 = por %p72, %p73
      %p75 = scmp.ne.s32.totalorder %s66, %s67
      %p76 = scmp.eq.s32.totalorder %s21, 0
      %p77 = por %p75, %p76
      %p78 = scmp.ne.s32.totalorder %s66, %s67
      %p79 = scmp.eq.s32.totalorder %s22, 1
      %p80 = por %p78, %p79
      %p82 = scmp.ne.s32.totalorder %s67, %s81
      %p83 = scmp.eq.s32.totalorder %s22, 0
      %p84 = por %p82, %p83
      %s86 = sadd.s32 %s85, 1
      %p89 = scmp.eq.s32.totalorder %s16, 1
      %p90 = scmp.ne.s32.totalorder %s85, %s87
      %p91 = scmp.eq.s32.totalorder %s16, 0
      %p92 = por %p90, %p91
      %p93 = scmp.ne.s32.totalorder %s85, %s87
      %p94 = scmp.eq.s32.totalorder %s21, 1
      %p95 = por %p93, %p94
      %p96 = scmp.ne.s32.totalorder %s87, %s88
      %p97 = scmp.eq.s32.totalorder %s21, 0
      %p98 = por %p96, %p97
      %p99 = scmp.ne.s32.totalorder %s87, %s88
      %p100 = scmp.eq.s32.totalorder %s22, 1
      %p101 = por %p99, %p100
      %p103 = scmp.ne.s32.totalorder %s88, %s102
      %p104 = scmp.eq.s32.totalorder %s22, 0
      %p105 = por %p103, %p104
      %s107 = sadd.s32 %s106, 1
      %p110 = scmp.eq.s32.totalorder %s16, 1
      %p111 = scmp.ne.s32.totalorder %s106, %s108
      %p112 = scmp.eq.s32.totalorder %s16, 0
      %p113 = por %p111, %p112
      %p114 = scmp.ne.s32.totalorder %s106, %s108
      %p115 = scmp.eq.s32.totalorder %s21, 1
      %p116 = por %p114, %p115
      %p117 = scmp.ne.s32.totalorder %s108, %s109
      %p118 = scmp.eq.s32.totalorder %s21, 0
      %p119 = por %p117, %p118
      %p120 = scmp.ne.s32.totalorder %s108, %s109
      %p121 = scmp.eq.s32.totalorder %s22, 1
      %p122 = por %p120, %p121
      %p124 = scmp.ne.s32.totalorder %s109, %s123
      %p125 = scmp.eq.s32.totalorder %s22, 0
      %p126 = por %p124, %p125
      %s128 = sadd.s32 %s127, 1
      %p131 = scmp.eq.s32.totalorder %s16, 1
      %p132 = scmp.ne.s32.totalorder %s127, %s129
      %p133 = scmp.eq.s32.totalorder %s16, 0
      %p134 = por %p132, %p133
      %p135 = scmp.ne.s32.totalorder %s127, %s129
      %p136 = scmp.eq.s32.totalorder %s21, 1
      %p137 = por %p135, %p136
      %p138 = scmp.ne.s32.totalorder %s129, %s130
      %p139 = scmp.eq.s32.totalorder %s21, 0
      %p140 = por %p138, %p139
      %p141 = scmp.ne.s32.totalorder %s129, %s130
      %p142 = scmp.eq.s32.totalorder %s22, 1
      %p143 = por %p141, %p142
      %p145 = scmp.ne.s32.totalorder %s130, %s144
      %p146 = scmp.eq.s32.totalorder %s22, 0
      %p147 = por %p145, %p146
      %s149 = sadd.s32 %s148, 1
      %p152 = scmp.eq.s32.totalorder %s16, 1
      %p153 = scmp.ne.s32.totalorder %s148, %s150
      %p154 = scmp.eq.s32.totalorder %s16, 0
      %p155 = por %p153, %p154
      %p156 = scmp.ne.s32.totalorder %s148, %s150
      %p157 = scmp.eq.s32.totalorder %s21, 1
      %p158 = por %p156, %p157
      %p159 = scmp.ne.s32.totalorder %s150, %s151
      %p160 = scmp.eq.s32.totalorder %s21, 0
      %p161 = por %p159, %p160
      %p162 = scmp.ne.s32.totalorder %s150, %s151
      %p163 = scmp.eq.s32.totalorder %s22, 1
      %p164 = por %p162, %p163
      %p166 = scmp.ne.s32.totalorder %s151, %s165
      %p167 = scmp.eq.s32.totalorder %s22, 0
      %p168 = por %p166, %p167
      %s170 = sadd.s32 %s169, 1
      %p173 = scmp.eq.s32.totalorder %s16, 1
      %p174 = scmp.ne.s32.totalorder %s169, %s171
      %p175 = scmp.eq.s32.totalorder %s16, 0
      %p176 = por %p174, %p175
      %p177 = scmp.ne.s32.totalorder %s169, %s171
      %p178 = scmp.eq.s32.totalorder %s21, 1
      %p179 = por %p177, %p178
      %p180 = scmp.ne.s32.totalorder %s171, %s172
      %p181 = scmp.eq.s32.totalorder %s21, 0
      %p182 = por %p180, %p181
      %p183 = scmp.ne.s32.totalorder %s171, %s172
      %p184 = scmp.eq.s32.totalorder %s22, 1
      %p185 = por %p183, %p184
      %p187 = scmp.ne.s32.totalorder %s172, %s186
      %p188 = scmp.eq.s32.totalorder %s22, 0
      %p189 = por %p187, %p188
      %s190 = ssub.s32 %s23, %s35
      %s191 = ssub.s32 %s24, %s31
      %s192 = sor.u32 %s190, %s191
      %p193 = scmp.eq.s32.totalorder %s192, 0
      %s195 = sadd.s32 %s194, 1
      %s196 = scalar_select %p193, %s194, %s195
      %p199 = pneg %p193
      %p200 = scmp.eq.s32.totalorder %s16, 1
      %p201 = por %p199, %p200
      %p202 = scmp.ne.s32.totalorder %s194, %s197
      %p203 = scmp.eq.s32.totalorder %s16, 0
      %p204 = por %p202, %p203
      %p205 = scmp.ne.s32.totalorder %s194, %s197
      %p206 = scmp.eq.s32.totalorder %s21, 1
      %p207 = por %p205, %p206
      %p208 = scmp.ne.s32.totalorder %s197, %s198
      %p209 = scmp.eq.s32.totalorder %s21, 0
      %p210 = por %p208, %p209
      %p211 = scmp.ne.s32.totalorder %s197, %s198
      %p212 = scmp.eq.s32.totalorder %s22, 1
      %p213 = por %p211, %p212
      %p215 = scmp.ne.s32.totalorder %s198, %s214
      %p216 = scmp.eq.s32.totalorder %s22, 0
      %p217 = por %p215, %p216
      %p218 = scmp.le.s32.totalorder 1, %s16
      %p219 = scmp.lt.s32.totalorder %s16, 3
      %p220 = pnand %p218, %p219
      %p221 = pneg %p220
      // Predicated region
      $region9: #{tpu_custom_call.1} parent=5 // pred_check
        _
      $region10: #{tpu_custom_call.1} parent=5 // pred_check_branch
        %223 = sbr.rel (%p220) target = $region12
      $region11: #{tpu_custom_call.1} parent=5 // pred_region
        %s224 = ssub.s32 %s16, 1
        // Predicated region
        $region13: #{tpu_custom_call.1} parent=11 // pred_check
          %p225 = pneg %p77
        $region14: #{tpu_custom_call.1} parent=11 // pred_check_branch
          %227 = sbr.rel (%p225) target = $region16
        $region15: #{tpu_custom_call.1} parent=11 // pred_region
          _
        $region16: #{tpu_custom_call.1} parent=11 // pred_fallthru
          _
        // Predicated region
        $region17: #{tpu_custom_call.1} parent=11 // pred_check
          %p228 = pneg %p98
        $region18: #{tpu_custom_call.1} parent=11 // pred_check_branch
          %230 = sbr.rel (%p228) target = $region20
        $region19: #{tpu_custom_call.1} parent=11 // pred_region
          _
        $region20: #{tpu_custom_call.1} parent=11 // pred_fallthru
          _
        // Predicated region
        $region21: #{tpu_custom_call.1} parent=11 // pred_check
          %p231 = pneg %p119
        $region22: #{tpu_custom_call.1} parent=11 // pred_check_branch
          %233 = sbr.rel (%p231) target = $region24
        $region23: #{tpu_custom_call.1} parent=11 // pred_region
          _
        $region24: #{tpu_custom_call.1} parent=11 // pred_fallthru
          _
        // Predicated region
        $region25: #{tpu_custom_call.1} parent=11 // pred_check
          %p234 = pneg %p140
        $region26: #{tpu_custom_call.1} parent=11 // pred_check_branch
          %236 = sbr.rel (%p234) target = $region28
        $region27: #{tpu_custom_call.1} parent=11 // pred_region
          _
        $region28: #{tpu_custom_call.1} parent=11 // pred_fallthru
          _
        // Predicated region
        $region29: #{tpu_custom_call.1} parent=11 // pred_check
          %p237 = pneg %p161
        $region30: #{tpu_custom_call.1} parent=11 // pred_check_branch
          %239 = sbr.rel (%p237) target = $region32
        $region31: #{tpu_custom_call.1} parent=11 // pred_region
          _
        $region32: #{tpu_custom_call.1} parent=11 // pred_fallthru
          _
        // Predicated region
        $region33: #{tpu_custom_call.1} parent=11 // pred_check
          %p240 = pneg %p182
        $region34: #{tpu_custom_call.1} parent=11 // pred_check_branch
          %242 = sbr.rel (%p240) target = $region36
        $region35: #{tpu_custom_call.1} parent=11 // pred_region
          _
        $region36: #{tpu_custom_call.1} parent=11 // pred_fallthru
          _
      $region12: #{tpu_custom_call.1} parent=5 // pred_fallthru
        _
      %p243 = scmp.lt.s32.totalorder %s16, 2
      // Predicated region
      $region37: #{tpu_custom_call.1} parent=5 // pred_check
        %p244 = pneg %p243
      $region38: #{tpu_custom_call.1} parent=5 // pred_check_branch
        %246 = sbr.rel (%p244) target = $region40
      $region39: #{tpu_custom_call.1} parent=5 // pred_region
        // Predicated region
        $region41: #{tpu_custom_call.1} parent=39 // pred_check
          %p247 = pneg %p50
        $region42: #{tpu_custom_call.1} parent=39 // pred_check_branch
          %249 = sbr.rel (%p247) target = $region44
        $region43: #{tpu_custom_call.1} parent=39 // pred_region
          %p250 = scmp.lt.s32.totalorder %s23, 1
          %s251 = scalar_select %p250, %s23, 1
          %p252 = scmp.lt.s32.totalorder %s24, 0
          %s253 = scalar_select %p252, %s24, 0
          %s254 = sadd.s32 %s253, %s251
          %s255 = smul.addr %s254, 4
          %s256 = scalar_lea.vmem %s0, %s255
        $region44: #{tpu_custom_call.1} parent=39 // pred_fallthru
          _
      $region40: #{tpu_custom_call.1} parent=5 // pred_fallthru
        _
      %p257 = scmp.le.s32.totalorder 1, %s16
      %p258 = scmp.lt.s32.totalorder %s16, 3
      %p259 = pnand %p257, %p258
      %p260 = pneg %p259
      // Predicated region
      $region45: #{tpu_custom_call.1} parent=5 // pred_check
        _
      $region46: #{tpu_custom_call.1} parent=5 // pred_check_branch
        %262 = sbr.rel (%p259) target = $region48
      $region47: #{tpu_custom_call.1} parent=5 // pred_region
        %s263 = ssub.s32 %s16, 1
        %p264 = scmp.lt.s32.totalorder %s25, 1
        %s265 = scalar_select %p264, %s25, 1
        %p266 = scmp.lt.s32.totalorder %s26, 0
        %s267 = scalar_select %p266, %s26, 0
        %s268 = sadd.s32 %s267, %s265
        %s269 = smul.addr %s268, 4
        %s270 = scalar_lea.vmem %s0, %s269
        %p271 = pneg %p56
        %p272 = pneg %p53
        %p273 = pneg %p77
        %p274 = pneg %p74
        %p275 = pneg %p98
        %p276 = pneg %p95
        %p277 = pneg %p119
        %p278 = pneg %p116
        %p279 = pneg %p140
        %p280 = pneg %p137
        %p281 = pneg %p161
        %p282 = pneg %p158
        %p283 = pneg %p182
        %p284 = pneg %p179
        %p285 = pneg %p210
        %p286 = pneg %p207
        %s287 = sand.u32 %s197, 1
        %s288 = scalar_lea.sflag [#allocation3], %s287
        %s289 = sand.u32 %s197, 1
        %s290 = smul.addr %s289, 8
        %s291 = scalar_lea.vmem [#allocation2], %s290
        %p292 = scmp.lt.s32.totalorder %s25, 1
        %s293 = scalar_select %p292, %s25, 1
        %p294 = scmp.lt.s32.totalorder %s26, 0
        %s295 = scalar_select %p294, %s26, 0
        %s296 = sadd.s32 %s295, %s293
        %s297 = smul.addr %s296, 4
        %s298 = scalar_lea.vmem %s0, %s297
        %v299 = vld [vmem:[%s298] sm:$0xf]
        %v300 = vld [vmem:[%s1] sm:$0xff]
        %v301 = vld [vmem:[%s1 + $0x8] sm:$0xff]
        %v302 = vld [vmem:[%s1 + $0x10] sm:$0xff]
        %v303 = vld [vmem:[%s1 + $0x18] sm:$0xff]
        %v304 = vld [vmem:[%s2] sm:$0xff]
        %v305 = vld [vmem:[%s2 + $0x8] sm:$0xff]
        %v306 = vld [vmem:[%s2 + $0x10] sm:$0xff]
        %v307 = vld [vmem:[%s2 + $0x18] sm:$0xff]
        %309 = vset.pattern.permute.xlu0 0
        %310 = vperm.xlu0 %309, %v304
        %v311 = vpop.permute.xlu0 %310
        %314 = vset.pattern.permute.xlu0 0
        %315 = vperm.xlu0 %314, %v305
        %v316 = vpop.permute.xlu0 %315
        %319 = vset.pattern.permute.xlu0 0
        %320 = vperm.xlu0 %319, %v306
        %v321 = vpop.permute.xlu0 %320
        %324 = vset.pattern.permute.xlu0 0
        %325 = vperm.xlu0 %324, %v307
        %v326 = vpop.permute.xlu0 %325
        %vm328 = vcmask 31744
        %v330 = vsel %vm328, %v300, 0
        %v333 = vsel %vm328, %v301, 0
        %v336 = vsel %vm328, %v302, 0
        %v339 = vsel %vm328, %v303, 0
        %vm341 = vcmask 1043456
        %v343 = vsel %vm341, %v299, 0
        %345 = vmatpush.msra.mxu0 0.0
        %346 = vmatpush.msra.mxu0 0.0
        %347 = vmatpush.msra.mxu0 0.0
        %348 = vmatpush.msra.mxu0 0.0
        %349 = vmatpush.msra.mxu0 0.0
        %350 = vmatpush.msra.mxu0 0.0
        %351 = vmatpush.msra.mxu0 0.0
        %352 = vmatpush.msra.mxu0 0.0
        %353 = vmatpush.msra.mxu0 0.0
        %354 = vmatpush.msra.mxu0 0.0
        %355 = vmatpush.msra.mxu0 0.0
        %356 = vmatpush.msra.mxu0 0.0
        %357 = vmatpush.msra.mxu0 0.0
        %358 = vmatpush.msra.mxu0 0.0
        %359 = vmatpush.msra.mxu0 0.0
        %360 = vmatpush.msra.mxu0 %v343
        %361 = vmatmul.f32.gmra.mxu0 %v330
        %v362 = vpop.f32.mrf.mxu0
        %v363 = vadd.f32 %v311, %v362
        %364 = vmatmul.f32.gmra.mxu0 %v333
        %v365 = vpop.f32.mrf.mxu0
        %v366 = vadd.f32 %v316, %v365
        %367 = vmatmul.f32.gmra.mxu0 %v336
        %v368 = vpop.f32.mrf.mxu0
        %v369 = vadd.f32 %v321, %v368
        %370 = vmatmul.f32.gmra.mxu0 %v339
        %v371 = vpop.f32.mrf.mxu0
        %v372 = vadd.f32 %v326, %v371
        %373 = vdwg.mxu0
        %v374 = vmax.f32 %v363, 0.0
        %v375 = vmax.f32 %v366, 0.0
        %v376 = vmax.f32 %v369, 0.0
        %v377 = vmax.f32 %v372, 0.0
        %v378 = vld [vmem:[%s3] sm:$0xff]
        %v379 = vld [vmem:[%s3 + $0x8] sm:$0xff]
        %v380 = vld [vmem:[%s3 + $0x10] sm:$0xff]
        %v381 = vld [vmem:[%s3 + $0x18] sm:$0xff]
        %v382 = vld [vmem:[%s4] sm:$0xff]
        %v383 = vld [vmem:[%s4 + $0x8] sm:$0xff]
        %v384 = vld [vmem:[%s4 + $0x10] sm:$0xff]
        %v385 = vld [vmem:[%s4 + $0x18] sm:$0xff]
        %387 = vset.pattern.permute.xlu0 0
        %388 = vperm.xlu0 %387, %v382
        %v389 = vpop.permute.xlu0 %388
        %392 = vset.pattern.permute.xlu0 0
        %393 = vperm.xlu0 %392, %v383
        %v394 = vpop.permute.xlu0 %393
        %397 = vset.pattern.permute.xlu0 0
        %398 = vperm.xlu0 %397, %v384
        %v399 = vpop.permute.xlu0 %398
        %402 = vset.pattern.permute.xlu0 0
        %403 = vperm.xlu0 %402, %v385
        %v404 = vpop.permute.xlu0 %403
        %vm406 = vcmask 261120
        %v408 = vsel %vm406, %v378, 0
        %v411 = vsel %vm406, %v379, 0
        %v414 = vsel %vm406, %v380, 0
        %v417 = vsel %vm406, %v381, 0
        %419 = vmatpush.msra.mxu0 0.0
        %420 = vmatpush.msra.mxu0 0.0
        %421 = vmatpush.msra.mxu0 0.0
        %422 = vmatpush.msra.mxu0 0.0
        %423 = vmatpush.msra.mxu0 0.0
        %424 = vmatpush.msra.mxu0 0.0
        %425 = vmatpush.msra.mxu0 0.0
        %426 = vmatpush.msra.mxu0 0.0
        %427 = vmatpush.msra.mxu0 0.0
        %428 = vmatpush.msra.mxu0 0.0
        %429 = vmatpush.msra.mxu0 0.0
        %430 = vmatpush.msra.mxu0 0.0
        %431 = vmatpush.msra.mxu0 %v377
        %432 = vmatpush.msra.mxu0 %v376
        %433 = vmatpush.msra.mxu0 %v375
        %434 = vmatpush.msra.mxu0 %v374
        %435 = vmatmul.f32.gmra.mxu0 %v408
        %v436 = vpop.f32.mrf.mxu0
        %v437 = vadd.f32 %v389, %v436
        %438 = vmatmul.f32.gmra.mxu0 %v411
        %v439 = vpop.f32.mrf.mxu0
        %v440 = vadd.f32 %v394, %v439
        %441 = vmatmul.f32.gmra.mxu0 %v414
        %v442 = vpop.f32.mrf.mxu0
        %v443 = vadd.f32 %v399, %v442
        %444 = vmatmul.f32.gmra.mxu0 %v417
        %v445 = vpop.f32.mrf.mxu0
        %v446 = vadd.f32 %v404, %v445
        %447 = vdwg.mxu0
        %v448 = vmax.f32 %v437, 0.0
        %v449 = vmax.f32 %v440, 0.0
        %v450 = vmax.f32 %v443, 0.0
        %v451 = vmax.f32 %v446, 0.0
        %v452 = vld [vmem:[%s5] sm:$0xff]
        %v453 = vld [vmem:[%s6] sm:$0xff]
        %455 = vset.pattern.permute.xlu0 0
        %456 = vperm.xlu0 %455, %v453
        %v457 = vpop.permute.xlu0 %456
        %v460 = vsel %vm406, %v452, 0
        %462 = vmatpush.msra.mxu0 0.0
        %463 = vmatpush.msra.mxu0 0.0
        %464 = vmatpush.msra.mxu0 0.0
        %465 = vmatpush.msra.mxu0 0.0
        %466 = vmatpush.msra.mxu0 0.0
        %467 = vmatpush.msra.mxu0 0.0
        %468 = vmatpush.msra.mxu0 0.0
        %469 = vmatpush.msra.mxu0 0.0
        %470 = vmatpush.msra.mxu0 0.0
        %471 = vmatpush.msra.mxu0 0.0
        %472 = vmatpush.msra.mxu0 0.0
        %473 = vmatpush.msra.mxu0 0.0
        %474 = vmatpush.msra.mxu0 %v451
        %475 = vmatpush.msra.mxu0 %v450
        %476 = vmatpush.msra.mxu0 %v449
        %477 = vmatpush.msra.mxu0 %v448
        %478 = vmatmul.f32.gmra.mxu0 %v460
        %v479 = vpop.f32.mrf.mxu0
        %v480 = vadd.f32 %v457, %v479
        %481 = vdwg.mxu0
        %vm482 = vcmask 130048
        %483 = vst.msk [vmem:[%s291] sm:$0xff] %vm482, %v480
        %s484 = sand.u32 %s197, 1
        %s485 = scalar_lea.sflag [#allocation3], %s484
        %s486 = sand.u32 %s197, 1
        %s487 = smul.addr %s486, 8
        %s488 = scalar_lea.vmem [#allocation2], %s487
        // Predicated region
        $region49: #{tpu_custom_call.1} parent=47 // pred_check
          %p489 = pneg %p207
        $region50: #{tpu_custom_call.1} parent=47 // pred_check_branch
          %491 = sbr.rel (%p489) target = $region52
        $region51: #{tpu_custom_call.1} parent=47 // pred_region
          %493 = vsyncadd %s485, 0
          %s494 = sadd.s32 %s26, %s25
          %s495 = smul.addr %s494, 8
          %s496 = scalar_lea.hbm %s7, %s495
          %s498 = sshll.u32 %s488, 4
          %s499 = int_to_ptr.vmem [resolvable:$true] %s498
          %s500 = sshll.u32 %s496, 4
          %s501 = int_to_ptr.hbm [resolvable:$true] %s500
          %503 = dma.vmem_to_hbm [thread:$0]  %s499, 128, %s501, %s485
        $region52: #{tpu_custom_call.1} parent=47 // pred_fallthru
          _
      $region48: #{tpu_custom_call.1} parent=5 // pred_fallthru
        _
      %p504 = scmp.le.s32.totalorder 2, %s16
      // Predicated region
      $region53: #{tpu_custom_call.1} parent=5 // pred_check
        %p505 = pneg %p504
      $region54: #{tpu_custom_call.1} parent=5 // pred_check_branch
        %507 = sbr.rel (%p505) target = $region56
      $region55: #{tpu_custom_call.1} parent=5 // pred_region
        %s508 = ssub.s32 %s16, 2
        // Predicated region
        $region57: #{tpu_custom_call.1} parent=55 // pred_check
          %p509 = pneg %p213
        $region58: #{tpu_custom_call.1} parent=55 // pred_check_branch
          %511 = sbr.rel (%p509) target = $region60
        $region59: #{tpu_custom_call.1} parent=55 // pred_region
          %s512 = sand.u32 %s198, 1
          %s513 = scalar_lea.sflag [#allocation3], %s512
          %s514 = sand.u32 %s198, 1
          %s515 = smul.addr %s514, 8
          %s516 = scalar_lea.vmem [#allocation2], %s515
          %518 = dma.done %s513, 128
        $region60: #{tpu_custom_call.1} parent=55 // pred_fallthru
          _
      $region56: #{tpu_custom_call.1} parent=5 // pred_fallthru
        _
    $region6: #{tpu_custom_call.1} parent=1 // loop_footer
      %s20 = sadd.s32 1, %s16
    $region7: #{tpu_custom_call.1} parent=1 // loop_footer_branch
      %15 = sbr.rel target = $region3
    $region8: #{tpu_custom_call.1} parent=1 // loop_exit
      _
    %519 = vsyncpa [#allocation3], 1
    %s520 = scalar_lea.sflag [#allocation3], 1
    %521 = vsyncpa %s520, 1

</llo_original>
